<compile_context>
chip_gen: v7x
topology: tpu7x:2x2x1
jax: 0.10.0
libtpu: 0.0.40
codegen_flags: <defaults>
</compile_context>

<pallas_src>
import math
from typing import NamedTuple

import numpy as np
import jax
import jax.numpy as jnp
from jax.experimental import pallas as pl
from jax.experimental.pallas import tpu as pltpu


# --------------------------------------------------------------------------
# Kernel
# --------------------------------------------------------------------------
def _timestep_kernel(t_ref, fp_ref, w1_ref, b1_ref, w2_ref, b2_ref, o_ref, h_ref):
    # t_ref:  (B, 1)           f32 timesteps
    # fp_ref: (2, dim)         f32; row 0 = [freqs, freqs], row 1 = [0, -pi/2]
    # w1_ref: (dim, hidden)    bf16 (resident, constant block index)
    # b1_ref: (1, hidden)      f32
    # w2_ref: (hidden, tn)     bf16 contiguous column tile (leading dim squeezed)
    # b2_ref: (1, tn)          f32 column tile
    # o_ref:  (B, tn)          output column tile
    # h_ref:  (B, hidden)      bf16 VMEM scratch holding SiLU(emb @ w1 + b1)

    # --- first layer: computed once per core shard (inner index == 0) -------
    @pl.when(pl.program_id(1) == 0)
    def _():
        t = t_ref[...]                                  # (B, 1)
        fp = fp_ref[...]                                # (2, dim)
        args = t * fp[0:1, :] + fp[1:2, :]              # (B, dim)
        emb = jnp.cos(args)                             # [cos(a), sin(a)] in one EUP pass
        h = jnp.dot(emb.astype(jnp.bfloat16), w1_ref[...],
                    preferred_element_type=jnp.float32) + b1_ref[...]
        h = h * jax.nn.sigmoid(h)                       # SiLU in f32
        h_ref[...] = h.astype(h_ref.dtype)              # store bf16 for MXU reuse

    # --- second layer: per column tile --------------------------------------
    out = jnp.dot(h_ref[...], w2_ref[...],
                  preferred_element_type=jnp.float32) + b2_ref[...]
    o_ref[...] = out.astype(o_ref.dtype)


# --------------------------------------------------------------------------
# One-time parameter preparation (bf16 cast, w2 pre-tiling, sinusoid table,
# generation-aware tile / VMEM-limit selection).
# --------------------------------------------------------------------------
class PreparedParams(NamedTuple):
    w1: jax.Array        # (dim, hidden)            bf16
    b1: jax.Array        # (1, hidden)              f32
    w2_tiled: jax.Array  # (num_tiles, hidden, tn)  bf16, contiguous per tile
    b2: jax.Array        # (1, hidden)              f32
    fp: jax.Array        # (2, dim)                 f32 freqs/phase table
    dim: int
    hidden: int
    tn: int
    num_tiles: int
    vmem_limit: int


def _vmem_capacity_bytes():
    # Conservative default = v7x's 64 MiB physical VMEM (smallest of v5e/v6e/v7x).
    cap = 64 * 1024 * 1024
    try:
        info = pltpu.get_tpu_info()
        cap = int(getattr(info, "vmem_capacity_bytes", cap)) or cap
    except Exception:
        pass
    return cap


def _choose_tile_and_vmem(dim, hidden, max_batch):
    cap = _vmem_capacity_bytes()
    budget = int(cap * 0.6)   # headroom for Mosaic internal scratch / padding

    def need(tn):
        n = 0
        n += 2 * max_batch * 4            # t (double-buffered, tiny)
        n += 2 * 2 * dim * 4              # freqs/phase table
        n += 2 * dim * hidden * 2         # w1 bf16, double-buffered resident
        n += 2 * hidden * 4               # b1
        n += 2 * hidden * tn * 2          # w2 bf16 column tile, double-buffered
        n += 2 * tn * 4                   # b2 tile
        n += 2 * max_batch * tn * 4       # output tile, double-buffered
        n += max_batch * hidden * 2       # h scratch (bf16)
        return n

    candidates = [t for t in (1024, 512, 256, 128) if hidden % t == 0]
    if not candidates:
        candidates = [hidden]             # no lane-aligned divisor: single tile
    tn = candidates[-1]
    for t in candidates:                  # largest tile that fits the budget
        if need(t) <= budget:
            tn = t
            break
    vmem_limit = int(min(cap, max(need(tn) + (8 << 20), 16 << 20)))
    return tn, vmem_limit


def prepare_params(params, *, dim, max_period=10000, max_batch=256):
    """Convert / pre-tile the module parameters ONCE (no per-call HBM traffic)."""
    assert dim % 2 == 0, "dim must be even"
    w1, b1, w2, b2 = params
    hidden = 4 * dim
    assert w1.shape == (dim, hidden) and w2.shape == (hidden, hidden)

    # Sinusoid table: row 0 = [freqs, freqs], row 1 = [0, -pi/2]  (cos(x-pi/2)=sin x).
    half = dim // 2
    freqs = np.exp(
        -math.log(max_period) * np.arange(half, dtype=np.float32) / half
    ).astype(np.float32)
    fp = np.stack([
        np.concatenate([freqs, freqs]),
        np.concatenate([np.zeros(half, np.float32),
                        np.full(half, -np.pi / 2.0, np.float32)]),
    ]).astype(np.float32)

    tn, vmem_limit = _choose_tile_and_vmem(dim, hidden, max_batch)
    num_tiles = hidden // tn

    w1_bf = w1.astype(jnp.bfloat16)
    # Pre-tile w2 so each (hidden, tn) column tile is one contiguous HBM region.
    w2_tiled = (w2.astype(jnp.bfloat16)
                  .reshape(hidden, num_tiles, tn)
                  .transpose(1, 0, 2))                     # (num_tiles, hidden, tn)
    b1_2d = b1.reshape(1, hidden).astype(jnp.float32)
    b2_2d = b2.reshape(1, hidden).astype(jnp.float32)

    return PreparedParams(w1_bf, b1_2d, w2_tiled, b2_2d, jnp.asarray(fp),
                          dim, hidden, tn, num_tiles, vmem_limit)


# --------------------------------------------------------------------------
# Per-call wrapper
# --------------------------------------------------------------------------
def timestep_embedding(t, prep: PreparedParams, *, out_dtype=jnp.float32):
    """t: (B,) float -> (B, 4*dim).  All weight prep lives in prepare_params()."""
    B = t.shape[0]
    dim, hidden, tn, num_tiles = prep.dim, prep.hidden, prep.tn, prep.num_tiles
    t2d = t.astype(jnp.float32).reshape(B, 1)

    # Outer "parallel" axis lets v7x shard column tiles across its 2 TensorCores;
    # inner "arbitrary" axis carries the resident h scratch.
    nc = 2 if (num_tiles >= 2 and num_tiles % 2 == 0) else 1
    tpc = num_tiles // nc
    grid = (nc, tpc)

    cost = pl.CostEstimate(
        flops=2 * B * hidden * (dim + hidden),
        transcendentals=B * (dim + hidden),            # cos + sigmoid
        bytes_accessed=int(prep.w1.size * 2 + prep.w2_tiled.size * 2
                           + prep.b1.size * 4 + prep.b2.size * 4
                           + prep.fp.size * 4 + B * 4 + B * hidden * 4),
    )

    return pl.pallas_call(
        _timestep_kernel,
        out_shape=jax.ShapeDtypeStruct((B, hidden), out_dtype),
        grid=grid,
        in_specs=[
            pl.BlockSpec((B, 1), lambda c, j: (0, 0)),             # timesteps
            pl.BlockSpec((2, dim), lambda c, j: (0, 0)),           # freqs + phase
            pl.BlockSpec((dim, hidden), lambda c, j: (0, 0)),      # w1 (resident)
            pl.BlockSpec((1, hidden), lambda c, j: (0, 0)),        # b1
            pl.BlockSpec((None, hidden, tn),                       # w2 contiguous tile
                         lambda c, j: (c * tpc + j, 0, 0)),
            pl.BlockSpec((1, tn), lambda c, j: (0, c * tpc + j)),  # b2 column tile
        ],
        out_specs=pl.BlockSpec((B, tn), lambda c, j: (0, c * tpc + j)),
        scratch_shapes=[pltpu.VMEM((B, hidden), jnp.bfloat16)],    # resident h
        compiler_params=pltpu.CompilerParams(
            dimension_semantics=("parallel", "arbitrary"),
            vmem_limit_bytes=prep.vmem_limit,
        ),
        cost_estimate=cost,
    )(t2d, prep.fp, prep.w1, prep.b1, prep.w2_tiled, prep.b2)


# --------------------------------------------------------------------------
# Init + pure-JAX reference (mirrors the PyTorch forward exactly, in f32)
# --------------------------------------------------------------------------
def init_params(key, dim):
    """Shapes match the PyTorch module (weights stored transposed: (in, out))."""
    hidden = dim * 4
    k1, k2, k3, k4 = jax.random.split(key, 4)
    w1 = jax.random.normal(k1, (dim, hidden), dtype=jnp.float32) * 0.02
    b1 = jax.random.normal(k2, (hidden,), dtype=jnp.float32) * 0.02
    w2 = jax.random.normal(k3, (hidden, hidden), dtype=jnp.float32) * 0.02
    b2 = jax.random.normal(k4, (hidden,), dtype=jnp.float32) * 0.02
    return w1, b1, w2, b2


def reference(t, params, *, dim, max_period=10000):
    w1, b1, w2, b2 = params
    half_dim = dim // 2
    freqs = jnp.exp(
        -math.log(max_period) * jnp.arange(half_dim, dtype=jnp.float32) / half_dim
    )
    args = t[:, None] * freqs[None, :]
    emb = jnp.concatenate([jnp.cos(args), jnp.sin(args)], axis=-1)
    h = emb @ w1 + b1
    h = h * jax.nn.sigmoid(h)
    return h @ w2 + b2


if __name__ == "__main__":
    dim = 32          # embedding dim (even); hidden = 4*dim = 128
    batch = 8

    key = jax.random.PRNGKey(0)
    k_t, k_p = jax.random.split(key)
    t = jax.random.uniform(k_t, (batch,), dtype=jnp.float32) * 1000.0
    params = init_params(k_p, dim)

    prep = prepare_params(params, dim=dim, max_batch=batch)   # one-time prep
    out = jax.block_until_ready(timestep_embedding(t, prep))
    ref = reference(t, params, dim=dim)

    assert out.shape == (batch, dim * 4), out.shape
    # Matmuls use bf16 weights/inputs (f32 accumulation), so compare against the
    # f32 reference with a correspondingly looser tolerance.
    max_err = float(jnp.max(jnp.abs(out - ref)))
    assert max_err < 1e-2, max_err
    print("KERNEL_OK")
</pallas_src>

<mosaic_0001>
module attributes {stable_mosaic.version = 11 : i64} {
  func.func @_timestep_kernel(%arg0: i32, %arg1: i32, %arg2: memref<8x1xf32, #tpu.memory_space<vmem>>, %arg3: memref<2x32xf32, #tpu.memory_space<vmem>>, %arg4: memref<32x128xbf16, #tpu.memory_space<vmem>>, %arg5: memref<1x128xf32, #tpu.memory_space<vmem>>, %arg6: memref<1x128x128xbf16, #tpu.memory_space<vmem>>, %arg7: memref<1x128xf32, #tpu.memory_space<vmem>>, %arg8: memref<8x128xf32, #tpu.memory_space<vmem>>, %arg9: memref<8x128xbf16, #tpu.memory_space<vmem>>) attributes {dimension_semantics = [#tpu.dimension_semantics<parallel>, #tpu.dimension_semantics<arbitrary>], iteration_bounds = array<i64: 1, 1>, scalar_prefetch = 0 : i64, scratch_operands = 1 : i64, tpu.core_type = #tpu.core_type<tc>, window_params = [{pipeline_mode = #tpu.pipeline_mode<synchronous>, transform_indices = @transform_0, window_bounds = array<i64: 8, 1>}, {pipeline_mode = #tpu.pipeline_mode<synchronous>, transform_indices = @transform_1, window_bounds = array<i64: 2, 32>}, {pipeline_mode = #tpu.pipeline_mode<synchronous>, transform_indices = @transform_2, window_bounds = array<i64: 32, 128>}, {pipeline_mode = #tpu.pipeline_mode<synchronous>, transform_indices = @transform_3, window_bounds = array<i64: 1, 128>}, {transform_indices = @transform_4, window_bounds = array<i64: 1, 128, 128>}, {transform_indices = @transform_5, window_bounds = array<i64: 1, 128>}, {transform_indices = @transform_6, window_bounds = array<i64: 8, 128>}]} {
    %c0_i32 = arith.constant 0 : i32
    %0 = arith.cmpi eq, %arg1, %c0_i32 : i32
    %1 = arith.extui %0 : i1 to i32
    %c0_i32_0 = arith.constant 0 : i32
    %2 = arith.cmpi ne, %1, %c0_i32_0 : i32
    scf.if %2 {
      %c0_9 = arith.constant 0 : index
      %c0_10 = arith.constant 0 : index
      %11 = vector.load %arg2[%c0_9, %c0_10] : memref<8x1xf32, #tpu.memory_space<vmem>>, vector<8x1xf32>
      %c0_11 = arith.constant 0 : index
      %c0_12 = arith.constant 0 : index
      %12 = vector.load %arg3[%c0_11, %c0_12] : memref<2x32xf32, #tpu.memory_space<vmem>>, vector<2x32xf32>
      %13 = vector.extract_strided_slice %12 {offsets = [0, 0], sizes = [1, 32], strides = [1, 1]} : vector<2x32xf32> to vector<1x32xf32>
      %14 = vector.broadcast %11 : vector<8x1xf32> to vector<8x32xf32>
      %15 = vector.broadcast %13 : vector<1x32xf32> to vector<8x32xf32>
      %16 = arith.mulf %14, %15 : vector<8x32xf32>
      %17 = vector.extract_strided_slice %12 {offsets = [1, 0], sizes = [1, 32], strides = [1, 1]} : vector<2x32xf32> to vector<1x32xf32>
      %18 = vector.broadcast %17 : vector<1x32xf32> to vector<8x32xf32>
      %19 = arith.addf %16, %18 : vector<8x32xf32>
      %20 = math.cos %19 : vector<8x32xf32>
      %21 = arith.truncf %20 : vector<8x32xf32> to vector<8x32xbf16>
      %c0_13 = arith.constant 0 : index
      %c0_14 = arith.constant 0 : index
      %22 = vector.load %arg4[%c0_13, %c0_14] : memref<32x128xbf16, #tpu.memory_space<vmem>>, vector<32x128xbf16>
      %cst_15 = arith.constant dense<0.000000e+00> : vector<8x128xf32>
      %23 = tpu.matmul %21, %22, %cst_15 {dimension_numbers = #tpu.dot_dimension_numbers<[1], [0], [0], [1], [0, 0, 1, 1], [], []>} : vector<8x32xbf16>, vector<32x128xbf16>, vector<8x128xf32> -> vector<8x128xf32>
      %c0_16 = arith.constant 0 : index
      %c0_17 = arith.constant 0 : index
      %24 = vector.load %arg5[%c0_16, %c0_17] : memref<1x128xf32, #tpu.memory_space<vmem>>, vector<1x128xf32>
      %25 = vector.broadcast %24 : vector<1x128xf32> to vector<8x128xf32>
      %26 = arith.addf %23, %25 : vector<8x128xf32>
      %27 = arith.negf %26 : vector<8x128xf32>
      %28 = math.exp %27 : vector<8x128xf32>
      %cst_18 = arith.constant 1.000000e+00 : f32
      %29 = vector.broadcast %cst_18 : f32 to vector<8x128xf32>
      %30 = arith.addf %29, %28 : vector<8x128xf32>
      %31 = arith.divf %29, %30 : vector<8x128xf32>
      %32 = arith.mulf %26, %31 : vector<8x128xf32>
      %33 = arith.truncf %32 : vector<8x128xf32> to vector<8x128xbf16>
      %c0_19 = arith.constant 0 : index
      %c0_20 = arith.constant 0 : index
      %34 = vector.load %arg9[%c0_19, %c0_20] : memref<8x128xbf16, #tpu.memory_space<vmem>>, vector<8x128xbf16>
      tpu.vector_store %arg9[%c0_19, %c0_20], %33 {strides = array<i32>} : memref<8x128xbf16, #tpu.memory_space<vmem>>, vector<8x128xbf16>,
    } else {
    }
    %c0 = arith.constant 0 : index
    %c0_1 = arith.constant 0 : index
    %3 = vector.load %arg9[%c0, %c0_1] : memref<8x128xbf16, #tpu.memory_space<vmem>>, vector<8x128xbf16>
    %c0_2 = arith.constant 0 : index
    %c0_3 = arith.constant 0 : index
    %c0_4 = arith.constant 0 : index
    %4 = vector.load %arg6[%c0_2, %c0_3, %c0_4] : memref<1x128x128xbf16, #tpu.memory_space<vmem>>, vector<1x128x128xbf16>
    %5 = vector.shape_cast %4 : vector<1x128x128xbf16> to vector<128x128xbf16>
    %cst = arith.constant dense<0.000000e+00> : vector<8x128xf32>
    %6 = tpu.matmul %3, %5, %cst {dimension_numbers = #tpu.dot_dimension_numbers<[1], [0], [0], [1], [0, 0, 1, 1], [], []>} : vector<8x128xbf16>, vector<128x128xbf16>, vector<8x128xf32> -> vector<8x128xf32>
    %c0_5 = arith.constant 0 : index
    %c0_6 = arith.constant 0 : index
    %7 = vector.load %arg7[%c0_5, %c0_6] : memref<1x128xf32, #tpu.memory_space<vmem>>, vector<1x128xf32>
    %8 = vector.broadcast %7 : vector<1x128xf32> to vector<8x128xf32>
    %9 = arith.addf %6, %8 : vector<8x128xf32>
    %c0_7 = arith.constant 0 : index
    %c0_8 = arith.constant 0 : index
    %10 = vector.load %arg8[%c0_7, %c0_8] : memref<8x128xf32, #tpu.memory_space<vmem>>, vector<8x128xf32>
    tpu.vector_store %arg8[%c0_7, %c0_8], %9 {strides = array<i32>} : memref<8x128xf32, #tpu.memory_space<vmem>>, vector<8x128xf32>,
    return
  }
  func.func @transform_0(%arg0: i32, %arg1: i32) -> (i32, i32) {
    %c0_i32 = arith.constant 0 : i32
    %c0_i32_0 = arith.constant 0 : i32
    %c0_i32_1 = arith.constant 0 : i32
    return %c0_i32, %c0_i32_0 : i32, i32
  }
  func.func @transform_1(%arg0: i32, %arg1: i32) -> (i32, i32) {
    %c0_i32 = arith.constant 0 : i32
    %c0_i32_0 = arith.constant 0 : i32
    %c0_i32_1 = arith.constant 0 : i32
    return %c0_i32, %c0_i32_0 : i32, i32
  }
  func.func @transform_2(%arg0: i32, %arg1: i32) -> (i32, i32) {
    %c0_i32 = arith.constant 0 : i32
    %c0_i32_0 = arith.constant 0 : i32
    %c0_i32_1 = arith.constant 0 : i32
    return %c0_i32, %c0_i32_0 : i32, i32
  }
  func.func @transform_3(%arg0: i32, %arg1: i32) -> (i32, i32) {
    %c0_i32 = arith.constant 0 : i32
    %c0_i32_0 = arith.constant 0 : i32
    %c0_i32_1 = arith.constant 0 : i32
    return %c0_i32, %c0_i32_0 : i32, i32
  }
  func.func @transform_4(%arg0: i32, %arg1: i32) -> (i32, i32, i32) {
    %c1_i32 = arith.constant 1 : i32
    %0 = arith.muli %arg0, %c1_i32 : i32
    %1 = arith.addi %0, %arg1 : i32
    %c0_i32 = arith.constant 0 : i32
    %c0_i32_0 = arith.constant 0 : i32
    %c0_i32_1 = arith.constant 0 : i32
    return %1, %c0_i32, %c0_i32_0 : i32, i32, i32
  }
  func.func @transform_5(%arg0: i32, %arg1: i32) -> (i32, i32) {
    %c1_i32 = arith.constant 1 : i32
    %0 = arith.muli %arg0, %c1_i32 : i32
    %1 = arith.addi %0, %arg1 : i32
    %c0_i32 = arith.constant 0 : i32
    %c0_i32_0 = arith.constant 0 : i32
    return %c0_i32, %1 : i32, i32
  }
  func.func @transform_6(%arg0: i32, %arg1: i32) -> (i32, i32) {
    %c1_i32 = arith.constant 1 : i32
    %0 = arith.muli %arg0, %c1_i32 : i32
    %1 = arith.addi %0, %arg1 : i32
    %c0_i32 = arith.constant 0 : i32
    %c0_i32_0 = arith.constant 0 : i32
    return %c0_i32, %1 : i32, i32
  }
}

</mosaic_0001>

<llo_original>
// kernel: tpu_custom_call.1
$region0: #{tpu_custom_call.1}
  #allocation0 [shape = 'u32[]', space=smem, size = 0x4, offset = 0x4, fixed_abs, tag = 'smem constant byte address 0x4 - core index']
  #allocation1 [shape = 'u32[144,128]{1,0:T(1,128)}', space=vmem, size = 0x12000, scoped, tag = 'internal scratch']
  #allocation2 [shape = 'bf16[8,128]{1,0:T(8,128)(2,1)}', space=vmem, size = 0x800, scoped, tag = 'scratch operand']
  %s0 = inlined_call_operand.vmem [shape: f32[8,1], index: 0, kind: input, shape index: {}]
  %s1 = inlined_call_operand.hbm [shape: f32[2,32], index: 1, kind: input, shape index: {}]
  %s2 = inlined_call_operand.vmem [shape: bf16[32,128], index: 2, kind: input, shape index: {}]
  %s3 = inlined_call_operand.vmem [shape: f32[1,128], index: 3, kind: input, shape index: {}]
  %s4 = inlined_call_operand.hbm [shape: bf16[1,128,128], index: 4, kind: input, shape index: {}]
  %s5 = inlined_call_operand.vmem [shape: f32[1,128], index: 5, kind: input, shape index: {}]
  %s6 = inlined_call_operand.hbm [shape: f32[8,128], index: 6, kind: output, shape index: {}]
  %s7 = sld [smem:[#allocation0]]
  $region46: #{tpu_custom_call.1} parent=0
    _
  %s9 = ssub.s32 1, %s7
  %s10 = scalar_select 0, %s9, %s7
  $region1: #{tpu_custom_call.1} parent=0
    #allocation3 [shape = 'u8[1024]{0}', space=vmem, size = 0x400, scoped, tag = 'input window, operand 1, single buffered']
    #allocation4 [shape = 's32[1]{0}', space=sflag, size = 0x4, scoped, tag = 'scoped memory for tpu_custom_call.1']
    #allocation5 [shape = 's32[1]{0}', space=sflag, size = 0x4, scoped, tag = 'scoped memory for tpu_custom_call.1']
    #allocation6 [shape = 'u8[32768]{0}', space=vmem, size = 0x8000, scoped, tag = 'input window, operand 4, single buffered']
    #allocation7 [shape = 's32[1]{0}', space=sflag, size = 0x4, scoped, tag = 'scoped memory for tpu_custom_call.1']
    #allocation8 [shape = 'u8[4096]{0}', space=vmem, size = 0x1000, scoped, tag = 'output window, operand 0, single buffered']
    %11 = vsyncpa [#allocation4], 0
    %12 = vsyncpa [#allocation7], 0
    %13 = vsyncpa [#allocation5], 0
    // Predicated region
    $region2: #{tpu_custom_call.1} parent=1 // pred_check
      _
    $region3: #{tpu_custom_call.1} parent=1 // pred_check_branch
      %15 = sbr.rel (0) target = $region5
    $region4: #{tpu_custom_call.1} parent=1 // pred_region
      _
    $region5: #{tpu_custom_call.1} parent=1 // pred_fallthru
      _
    // Predicated region
    $region6: #{tpu_custom_call.1} parent=1 // pred_check
      _
    $region7: #{tpu_custom_call.1} parent=1 // pred_check_branch
      %17 = sbr.rel (0) target = $region9
    $region8: #{tpu_custom_call.1} parent=1 // pred_region
      %s19 = ssub.s32 32, 32
      %20 = vsyncadd [#allocation4], %s19
      %s22 = sshll.u32 [#allocation3], 4
      %s23 = int_to_ptr.vmem [resolvable:$true] %s22
      %25 = dma.hbm_to_vmem [thread:$0]  %s1, 32, %s23, [#allocation4]
    $region9: #{tpu_custom_call.1} parent=1 // pred_fallthru
      _
    // Predicated region
    $region10: #{tpu_custom_call.1} parent=1 // pred_check
      _
    $region11: #{tpu_custom_call.1} parent=1 // pred_check_branch
      %27 = sbr.rel (0) target = $region13
    $region12: #{tpu_custom_call.1} parent=1 // pred_region
      _
    $region13: #{tpu_custom_call.1} parent=1 // pred_fallthru
      _
    // Predicated region
    $region14: #{tpu_custom_call.1} parent=1 // pred_check
      _
    $region15: #{tpu_custom_call.1} parent=1 // pred_check_branch
      %29 = sbr.rel (0) target = $region17
    $region16: #{tpu_custom_call.1} parent=1 // pred_region
      _
    $region17: #{tpu_custom_call.1} parent=1 // pred_fallthru
      _
    // Predicated region
    $region18: #{tpu_custom_call.1} parent=1 // pred_check
      _
    $region19: #{tpu_custom_call.1} parent=1 // pred_check_branch
      %31 = sbr.rel (0) target = $region21
    $region20: #{tpu_custom_call.1} parent=1 // pred_region
      %s32 = sadd.s32 0, 0
      %s34 = ssub.s32 1024, 1024
      %35 = vsyncadd [#allocation7], %s34
      %s36 = smul.addr %s32, 16
      %s37 = smul.addr %s36, 64
      %s38 = scalar_lea.hbm %s4, %s37
      %s39 = sshll.u32 [#allocation6], 4
      %s40 = int_to_ptr.vmem [resolvable:$true] %s39
      %45 = dma.hbm_to_vmem [thread:$0]  %s38, 1024, %s40, [#allocation7], 64, 64, 4
    $region21: #{tpu_custom_call.1} parent=1 // pred_fallthru
      _
    // Predicated region
    $region22: #{tpu_custom_call.1} parent=1 // pred_check
      _
    $region23: #{tpu_custom_call.1} parent=1 // pred_check_branch
      %47 = sbr.rel (0) target = $region25
    $region24: #{tpu_custom_call.1} parent=1 // pred_region
      %s48 = sadd.s32 0, 0
      %p49 = scmp.lt.s32.totalorder %s48, 0
      %s50 = scalar_select %p49, %s48, 0
      %s51 = scalar_lea.vmem %s5, %s50
      %s52 = sadd.s32 0, 0
    $region25: #{tpu_custom_call.1} parent=1 // pred_fallthru
      _
    // Predicated region
    $region26: #{tpu_custom_call.1} parent=1 // pred_check
      _
    $region27: #{tpu_custom_call.1} parent=1 // pred_check_branch
      %54 = sbr.rel (0) target = $region29
    $region28: #{tpu_custom_call.1} parent=1 // pred_region
      %55 = dma.done [#allocation4], 32
    $region29: #{tpu_custom_call.1} parent=1 // pred_fallthru
      _
    // Predicated region
    $region30: #{tpu_custom_call.1} parent=1 // pred_check
      _
    $region31: #{tpu_custom_call.1} parent=1 // pred_check_branch
      %57 = sbr.rel (0) target = $region33
    $region32: #{tpu_custom_call.1} parent=1 // pred_region
      %58 = dma.done [#allocation7], 1024
    $region33: #{tpu_custom_call.1} parent=1 // pred_fallthru
      _
    %s59 = sadd.s32 0, 0
    %p60 = scmp.lt.s32.totalorder %s59, 0
    %s61 = scalar_select %p60, %s59, 0
    %s62 = scalar_lea.vmem %s5, %s61
    %s63 = sadd.s32 0, 0
    %s64 = sadd.s32 0, 0
    %p65 = scmp.lt.s32.totalorder %s64, 0
    %s66 = scalar_select %p65, %s64, 0
    %s67 = scalar_lea.vmem %s5, %s66
    %s68 = sadd.s32 0, 0
    %s69 = sadd.s32 0, 0
    %p71 = scmp.eq.s32.totalorder 0, 0
    // Predicated region
    $region34: #{tpu_custom_call.1} parent=1 // pred_check
      %p72 = pneg %p71
    $region35: #{tpu_custom_call.1} parent=1 // pred_check_branch
      %74 = sbr.rel (%p72) target = $region37
    $region36: #{tpu_custom_call.1} parent=1 // pred_region
      %v75 = vld [vmem:[%s0] sm:$0xff]
      %v76 = vld [vmem:[#allocation3] sm:$0x3]
      %78 = vset.pattern.permute.xlu0 0
      %79 = vperm.xlu0 %78, %v75
      %v80 = vpop.permute.xlu0 %79
      %v82 = vlaneseq
      %v83 = vshrl.u32 %v82, 7
      %v84 = vsub.s32 0, %v83
      %v85 = vrot.slane %v76, %v84
      %v86 = vmul.f32 %v80, %v85
      %v87 = vlaneseq
      %v88 = vshrl.u32 %v87, 7
      %v89 = vsub.s32 1, %v88
      %v90 = vrot.slane %v76, %v89
      %v91 = vadd.f32 %v86, %v90
      %v92 = vand.u32 2147483647, %v91
      %vm93 = vcmp.le.f32.partialorder %v92, 0.7853982
      %vm94 = vcmp.lt.s32.totalorder %v91, 0
      %v95 = vand.u32 %v91, 2139095040
      %v96 = vshrl.u32 %v95, 23
      %v97 = vsub.s32 %v96, 127
      %v98 = vand.u32 2147483647, %v91
      %v99 = vand.u32 %v98, 8388607
      %v100 = vor.u32 %v99, 8388608
      %v101 = vsub.s32 0, %v100
      %v102 = vadd.s32 %v97, 1
      %vm103 = vcmp.gt.s32.totalorder %v102, 0
      %v104 = vsel %vm103, %v102, 0
      %v105 = vshrl.u32 %v104, 5
      %v106 = vand.u32 %v104, 31
      %v107 = vsub.s32 32, %v106
      %v108 = vshrl.u32 683565275, %v107
      %v109 = vshll.u32 683565275, %v106
      %v110 = vshrl.u32 2475754826, %v107
      %v111 = vor.u32 %v109, %v110
      %v112 = vshll.u32 2475754826, %v106
      %v113 = vshrl.u32 2131351028, %v107
      %v114 = vor.u32 %v112, %v113
      %v115 = vshll.u32 2131351028, %v106
      %v116 = vshrl.u32 2102212464, %v107
      %v117 = vor.u32 %v115, %v116
      %v118 = vshll.u32 2102212464, %v106
      %v119 = vshrl.u32 920167782, %v107
      %v120 = vor.u32 %v118, %v119
      %v121 = vshll.u32 920167782, %v106
      %v122 = vshrl.u32 1326507024, %v107
      %v123 = vor.u32 %v121, %v122
      %vm124 = vcmp.lt.s32.totalorder %v105, 1
      %vm125 = vcmp.lt.s32.totalorder %v105, 2
      %vm126 = vcmp.lt.s32.totalorder %v105, 3
      %vm127 = vcmp.lt.s32.totalorder %v105, 4
      %v128 = vsel %vm124, %v108, %v111
      %v129 = vsel %vm127, %v117, 2102212464
      %v130 = vsel %vm126, %v114, %v129
      %v131 = vsel %vm125, %v128, %v130
      %v132 = vsel %vm124, %v111, %v114
      %v133 = vsel %vm127, %v120, 920167782
      %v134 = vsel %vm126, %v117, %v133
      %v135 = vsel %vm125, %v132, %v134
      %v136 = vsel %vm124, %v114, %v117
      %v137 = vsel %vm127, %v123, 1326507024
      %v138 = vsel %vm126, %v120, %v137
      %v139 = vsel %vm125, %v136, %v138
      %v140 = vshll.u32 %v100, 8
      %v141 = vmul.u32.u64.compose %v140, %v139
      %v142 = vextract.low.u32 %v141
      %v143 = vextract.high.u32 %v141
      %v144 = vmul.u32.u64.compose %v140, %v135
      %v145 = vextract.low.u32 %v144
      %v146 = vextract.high.u32 %v144
      %v147 = vmul.u32 %v140, %v131
      %v148 = vadd.s32 %v143, %v145
      %vm149 = vc.u32 %v143, %v145
      %v150 = vadd.s32 %v146, 1
      %v151 = vsel %vm149, %v150, %v146
      %v152 = vadd.s32 %v147, %v151
      %v153 = vadd.s32 %v152, 536870912
      %v154 = vshrl.u32 %v153, 30
      %v155 = vshll.u32 %v154, 30
      %v156 = vsub.s32 %v152, %v155
      %vm157 = vcmp.lt.s32.totalorder %v156, 0
      %v158 = vsub.s32 0, %v156
      %v159 = vsel %vm157, %v158, %v156
      %v160 = vclz %v159
      %v161 = vsub.s32 %v160, 2
      %vm162 = vcmp.gt.s32.totalorder 0, %v161
      %v163 = vsel %vm162, 0, %v161
      %v164 = vsub.s32 32, %v163
      %v165 = vshll.u32 %v156, %v163
      %v166 = vshrl.u32 %v148, %v164
      %v167 = vor.u32 %v165, %v166
      %v168 = vsub.s32 4294967266, %v163
      %v169 = vadd.s32 %v168, 127
      %v170 = vshll.u32 %v169, 23
      %v171 = vor.u32 4788187, %v170
      %v172 = vand.u32 2147483647, %v171
      %v174 = vcvt.s32.f32 %v167
      %v175 = vmul.f32 %v174, %v172
      %v176 = vxor.u32 %v175, 2147483648
      %v177 = vsel %vm94, %v176, %v175
      %v178 = vsub.s32 4, %v154
      %v179 = vsel %vm94, %v178, %v154
      %v180 = vsel %vm93, %v91, %v177
      %v181 = vsel %vm93, 0, %v179
      %v182 = vcosq.f32.pop %v180
      %v183 = vsinq.f32.pop %v180
      %vm184 = vweird.f32 %v91
      %v185 = vand.u32 %v181, 3
      %vm186 = vcmp.lt.s32.totalorder %v185, 2
      %vm187 = vcmp.eq.s32.totalorder %v185, 0
      %v188 = vxor.u32 %v183, 2147483648
      %v189 = vsel %vm187, %v182, %v188
      %vm190 = vcmp.eq.s32.totalorder %v185, 2
      %v191 = vxor.u32 %v182, 2147483648
      %v192 = vsel %vm190, %v191, %v183
      %v193 = vsel %vm186, %v189, %v192
      %v194 = vsel %vm184, nan, %v193
      %v195 = vpack.c.bf16 %v194, %v194
      %v196 = vld [vmem:[%s2] sm:$0xf]
      %v197 = vld [vmem:[%s2 + $0x4] sm:$0xf]
      %v198 = vld [vmem:[%s2 + $0x8] sm:$0xf]
      %v199 = vld [vmem:[%s2 + $0xc] sm:$0xf]
      %v200 = vld [vmem:[%s3] sm:$0x1]
      %v202 = vlaneseq
      %v203 = vshrl.u32 %v202, 7
      %v204 = vsub.s32 0, %v203
      %v205 = vrot.slane %v200, %v204
      %v211 = vunpack.c.l.b16 %v196
      %v212 = vunpack.c.l.b16 %v197
      %v213 = vunpack.c.l.b16 %v198
      %v214 = vunpack.c.l.b16 %v199
      %v215 = vpack.c.b16 %v212, %v211
      %v216 = vpack.c.b16 %v214, %v213
      %vm219 = vcmask 261120
      %v221 = vsel %vm219, %v195, 0
      %223 = vmatprep.subr.bf16.mxu0 0
      %224 = vmatpush1.bf16.msra.mxu0 %v215
      %225 = vmatprep.subr.bf16.mxu0 0
      %226 = vmatpush1.bf16.msra.mxu0 %v216
      %227 = vmatprep.subr.bf16.mxu0 0
      %228 = vmatpush1.bf16.msra.mxu0 0
      %229 = vmatprep.subr.bf16.mxu0 0
      %230 = vmatpush1.bf16.msra.mxu0 0
      %231 = vmatprep.subr.bf16.mxu0 0
      %232 = vmatpush1.bf16.msra.mxu0 0
      %233 = vmatprep.subr.bf16.mxu0 0
      %234 = vmatpush1.bf16.msra.mxu0 0
      %235 = vmatprep.subr.bf16.mxu0 0
      %236 = vmatpush1.bf16.msra.mxu0 0
      %237 = vmatprep.subr.bf16.mxu0 0
      %238 = vmatpush1.bf16.msra.mxu0 0
      %239 = vmatprep.subr.bf16.mxu0 0
      %240 = vmatpush1.bf16.msra.mxu0 0
      %241 = vmatprep.subr.bf16.mxu0 0
      %242 = vmatpush1.bf16.msra.mxu0 0
      %243 = vmatprep.subr.bf16.mxu0 0
      %244 = vmatpush1.bf16.msra.mxu0 0
      %245 = vmatprep.subr.bf16.mxu0 0
      %246 = vmatpush1.bf16.msra.mxu0 0
      %247 = vmatprep.subr.bf16.mxu0 0
      %248 = vmatpush1.bf16.msra.mxu0 0
      %249 = vmatprep.subr.bf16.mxu0 0
      %250 = vmatpush1.bf16.msra.mxu0 0
      %251 = vmatprep.subr.bf16.mxu0 0
      %252 = vmatpush1.bf16.msra.mxu0 0
      %253 = vmatprep.subr.bf16.mxu0 0
      %254 = vmatpush1.bf16.msra.mxu0 0
      %255 = vmatprep.mubr.bf16.mxu0 0
      %256 = vmatmul.mubr.bf16.gmra.mrb[0].mxu0 %v221
      %v257 = vpop.f32.mrb[0].mxu0
      %v258 = vadd.f32 %v205, %v257
      %v259 = vpop.f32.mrb[0].mxu0
      %v260 = vpop.f32.mrb[0].mxu0
      %v261 = vpop.f32.mrb[0].mxu0
      %262 = vdwg.mxu0
      %v263 = vxor.u32 %v258, 2147483648
      %v264 = vmul.f32 %v263, 1.442695
      %v265 = vpow.pop %v264
      %v266 = vadd.f32 %v265, 1.0
      %v267 = vrcp.pop %v266
      %v268 = vmul.f32 1.0, %v267
      %v269 = vmul.f32 %v258, %v268
      %v270 = vpack.c.bf16 %v269, %v269
      %271 = vst [vmem:[#allocation2] sm:$0xf] %v270
    $region37: #{tpu_custom_call.1} parent=1 // pred_fallthru
      _
    %v272 = vld [vmem:[#allocation2] sm:$0xf]
    %v273 = vld [vmem:[#allocation6] sm:$0xf]
    %v274 = vld [vmem:[#allocation6 + $0x4] sm:$0xf]
    %v275 = vld [vmem:[#allocation6 + $0x8] sm:$0xf]
    %v276 = vld [vmem:[#allocation6 + $0xc] sm:$0xf]
    %v277 = vld [vmem:[#allocation6 + $0x10] sm:$0xf]
    %v278 = vld [vmem:[#allocation6 + $0x14] sm:$0xf]
    %v279 = vld [vmem:[#allocation6 + $0x18] sm:$0xf]
    %v280 = vld [vmem:[#allocation6 + $0x1c] sm:$0xf]
    %v281 = vld [vmem:[#allocation6 + $0x20] sm:$0xf]
    %v282 = vld [vmem:[#allocation6 + $0x24] sm:$0xf]
    %v283 = vld [vmem:[#allocation6 + $0x28] sm:$0xf]
    %v284 = vld [vmem:[#allocation6 + $0x2c] sm:$0xf]
    %v285 = vld [vmem:[#allocation6 + $0x30] sm:$0xf]
    %v286 = vld [vmem:[#allocation6 + $0x34] sm:$0xf]
    %v287 = vld [vmem:[#allocation6 + $0x38] sm:$0xf]
    %v288 = vld [vmem:[#allocation6 + $0x3c] sm:$0xf]
    %v289 = vld [vmem:[%s67] sm:$0x1]
    %v291 = vlaneseq
    %v292 = vshrl.u32 %v291, 7
    %v293 = vsub.s32 0, %v292
    %v294 = vrot.slane %v289, %v293
    %v312 = vunpack.c.l.b16 %v273
    %v313 = vunpack.c.l.b16 %v274
    %v314 = vunpack.c.l.b16 %v275
    %v315 = vunpack.c.l.b16 %v276
    %v316 = vunpack.c.l.b16 %v277
    %v317 = vunpack.c.l.b16 %v278
    %v318 = vunpack.c.l.b16 %v279
    %v319 = vunpack.c.l.b16 %v280
    %v320 = vunpack.c.l.b16 %v281
    %v321 = vunpack.c.l.b16 %v282
    %v322 = vunpack.c.l.b16 %v283
    %v323 = vunpack.c.l.b16 %v284
    %v324 = vunpack.c.l.b16 %v285
    %v325 = vunpack.c.l.b16 %v286
    %v326 = vunpack.c.l.b16 %v287
    %v327 = vunpack.c.l.b16 %v288
    %v328 = vpack.c.b16 %v313, %v312
    %v329 = vpack.c.b16 %v315, %v314
    %v330 = vpack.c.b16 %v317, %v316
    %v331 = vpack.c.b16 %v319, %v318
    %v332 = vpack.c.b16 %v321, %v320
    %v333 = vpack.c.b16 %v323, %v322
    %v334 = vpack.c.b16 %v325, %v324
    %v335 = vpack.c.b16 %v327, %v326
    %344 = vmatprep.subr.bf16.mxu0 0
    %345 = vmatpush1.bf16.msra.mxu0 %v328
    %346 = vmatprep.subr.bf16.mxu0 0
    %347 = vmatpush1.bf16.msra.mxu0 %v329
    %348 = vmatprep.subr.bf16.mxu0 0
    %349 = vmatpush1.bf16.msra.mxu0 %v330
    %350 = vmatprep.subr.bf16.mxu0 0
    %351 = vmatpush1.bf16.msra.mxu0 %v331
    %352 = vmatprep.subr.bf16.mxu0 0
    %353 = vmatpush1.bf16.msra.mxu0 %v332
    %354 = vmatprep.subr.bf16.mxu0 0
    %355 = vmatpush1.bf16.msra.mxu0 %v333
    %356 = vmatprep.subr.bf16.mxu0 0
    %357 = vmatpush1.bf16.msra.mxu0 %v334
    %358 = vmatprep.subr.bf16.mxu0 0
    %359 = vmatpush1.bf16.msra.mxu0 %v335
    %360 = vmatprep.subr.bf16.mxu0 0
    %361 = vmatpush1.bf16.msra.mxu0 0
    %362 = vmatprep.subr.bf16.mxu0 0
    %363 = vmatpush1.bf16.msra.mxu0 0
    %364 = vmatprep.subr.bf16.mxu0 0
    %365 = vmatpush1.bf16.msra.mxu0 0
    %366 = vmatprep.subr.bf16.mxu0 0
    %367 = vmatpush1.bf16.msra.mxu0 0
    %368 = vmatprep.subr.bf16.mxu0 0
    %369 = vmatpush1.bf16.msra.mxu0 0
    %370 = vmatprep.subr.bf16.mxu0 0
    %371 = vmatpush1.bf16.msra.mxu0 0
    %372 = vmatprep.subr.bf16.mxu0 0
    %373 = vmatpush1.bf16.msra.mxu0 0
    %374 = vmatprep.subr.bf16.mxu0 0
    %375 = vmatpush1.bf16.msra.mxu0 0
    %376 = vmatprep.mubr.bf16.mxu0 0
    %377 = vmatmul.mubr.bf16.gmra.mrb[0].mxu0 %v272
    %v378 = vpop.f32.mrb[0].mxu0
    %v379 = vadd.f32 %v294, %v378
    %v380 = vpop.f32.mrb[0].mxu0
    %v381 = vpop.f32.mrb[0].mxu0
    %v382 = vpop.f32.mrb[0].mxu0
    %383 = vdwg.mxu0
    %384 = vst [vmem:[#allocation8] sm:$0xff] %v379
    // Predicated region
    $region38: #{tpu_custom_call.1} parent=1 // pred_check
      _
    $region39: #{tpu_custom_call.1} parent=1 // pred_check_branch
      %386 = sbr.rel (0) target = $region41
    $region40: #{tpu_custom_call.1} parent=1 // pred_region
      %s387 = sadd.s32 0, 0
      %s389 = ssub.s32 128, 128
      %390 = vsyncadd [#allocation5], %s389
      %s391 = smul.addr %s387, 128
      %s392 = scalar_lea.hbm %s6, %s391
      %s394 = sshll.u32 [#allocation8], 4
      %s395 = int_to_ptr.vmem [resolvable:$true] %s394
      %397 = dma.vmem_to_hbm [thread:$0]  %s395, 128, %s392, [#allocation5]
    $region41: #{tpu_custom_call.1} parent=1 // pred_fallthru
      _
    // Predicated region
    $region42: #{tpu_custom_call.1} parent=1 // pred_check
      _
    $region43: #{tpu_custom_call.1} parent=1 // pred_check_branch
      %399 = sbr.rel (0) target = $region45
    $region44: #{tpu_custom_call.1} parent=1 // pred_region
      %400 = dma.done [#allocation5], 128
    $region45: #{tpu_custom_call.1} parent=1 // pred_fallthru
      _
    %401 = vsyncpa [#allocation4], 1
    %402 = vsyncpa [#allocation7], 1
    %403 = vsyncpa [#allocation5], 1

</llo_original>
